<compile_context>
chip_gen: v7x
topology: tpu7x:2x2x1
jax: 0.10.0
libtpu: 0.0.40
codegen_flags: <defaults>
</compile_context>

<pallas_src>
import functools

import jax
import jax.numpy as jnp
from jax import lax
from jax.experimental import pallas as pl
from jax.experimental.pallas import tpu as pltpu

_LANE = 128
_SUBLANE = 8
_TC_CAP = 16384                       # keep tc == HW (nc == 1) for typical heatmaps
_CHUNK_CAP = 512                      # lane width processed per accumulate step
_TILE_BYTE_BUDGET = 4 * 1024 * 1024   # per-input VMEM buffer (Pallas double-buffers)
_VMEM_LIMIT_BYTES = 32 * 1024 * 1024  # safe on v5e/v6e (128 MiB) and v7x (64 MiB)


def _round_up(x, m):
    return ((x + m - 1) // m) * m


def _make_kernel(*, slab, n_slabs, chunk, n_chunks, rows_total, row_tile,
                 need_row_mask, weighted):
    """Build the kernel body.

    Refs: pred (tr, tc) native dtype, gt (tr, tc) native dtype,
          [w (tr, 1) f32 if weighted], out (8, 128) f32 partial sums.
    """

    def kernel(*refs):
        if weighted:
            pred_ref, gt_ref, w_ref, out_ref = refs
        else:
            pred_ref, gt_ref, out_ref = refs
            w_ref = None

        j = pl.program_id(1)
        row_base = pl.program_id(0) * row_tile   # global row offset of this block

        def slab_body(i, acc):
            r0 = pl.multiple_of(i * slab, slab)
            if weighted:
                w = w_ref[pl.ds(r0, slab), :]                        # (slab, 1) f32
                wb = jnp.broadcast_to(w, (slab, chunk))              # hoisted per slab
            if need_row_mask:
                rows = (lax.broadcasted_iota(jnp.int32, (slab, chunk), 0)
                        + (row_base + r0))
                rmask = rows < rows_total
            for c in range(n_chunks):
                # In-kernel upcast: stream native dtype from HBM, cast on VPU.
                p = pred_ref[pl.ds(r0, slab), pl.ds(c * chunk, chunk)].astype(jnp.float32)
                g = gt_ref[pl.ds(r0, slab), pl.ds(c * chunk, chunk)].astype(jnp.float32)
                d = p - g
                if weighted:
                    d = d * wb
                sq = d * d
                if need_row_mask:
                    sq = jnp.where(rmask, sq, 0.0)
                acc = acc + sq
            return acc

        acc = lax.fori_loop(0, n_slabs, slab_body,
                            jnp.zeros((slab, chunk), jnp.float32),
                            unroll=n_slabs <= 4)

        # Fold packed sublane groups (slab -> 8) then lane chunks (chunk -> 128):
        # tile-aligned static slices -> pure vreg-wise VALU adds (no XLU reduce).
        out = acc[0:_SUBLANE, :]
        for s in range(1, slab // _SUBLANE):
            out = out + acc[s * _SUBLANE:(s + 1) * _SUBLANE, :]
        folded = out[:, 0:_LANE]
        for t in range(1, chunk // _LANE):
            folded = folded + out[:, t * _LANE:(t + 1) * _LANE]

        # Column axis (j) is a reduction axis: output block resident across it.
        @pl.when(j == 0)
        def _():
            out_ref[...] = jnp.zeros_like(out_ref)

        out_ref[...] += folded

    return kernel


@functools.partial(jax.jit, static_argnames=("use_target_weight",))
def joints_mse_loss(output, target, target_weight, *, use_target_weight=True):
    """JointsMSELoss forward.

    output/target: (B, J, H, W); target_weight: (B, J_real, 1),
    with J == J_real or J == 2 * J_real (mirrors the PyTorch module).
    """
    B, J, H, W = output.shape
    HW = H * W
    R = B * J
    J_real = target_weight.shape[1]
    assert J == J_real or J == 2 * J_real, "some thing unexpect hapen."

    # Free, contiguous reshape in the NATIVE dtype (no transpose, no wrapper cast).
    pred = output.reshape(R, HW)
    gt = target.reshape(R, HW)

    def _packing(dt):
        return max(1, 4 // jnp.dtype(dt).itemsize)

    pack = max(_packing(pred.dtype), _packing(gt.dtype))
    slab = _SUBLANE * pack            # 8 for f32, 16 for bf16/f16, 32 for 8-bit

    # Lane alignment: pad to a multiple of 128 in the rare unaligned case.
    HW_p = _round_up(HW, _LANE)
    if HW_p != HW:
        # TODO(synk): rare path costs one extra HBM pass; padded diffs are 0 so exact.
        pred = jnp.pad(pred, ((0, 0), (0, HW_p - HW)))
        gt = jnp.pad(gt, ((0, 0), (0, HW_p - HW)))

    # Column tile: prefer the full contiguous row (nc == 1); else largest 128-multiple
    # divisor of HW_p under the cap.
    if HW_p <= _TC_CAP:
        tc = HW_p
    else:
        tc = _LANE
        m = _LANE
        while m <= _TC_CAP:
            if HW_p % m == 0:
                tc = m
            m += _LANE
    nc = HW_p // tc

    # Row tile: biggest slab multiple within the per-buffer VMEM byte budget.
    max_item = max(jnp.dtype(pred.dtype).itemsize, jnp.dtype(gt.dtype).itemsize)
    budget_rows = max(slab, (_TILE_BYTE_BUDGET // (tc * max_item)) // slab * slab)
    tr = min(_round_up(R, slab), budget_rows)
    nr = pl.cdiv(R, tr)
    if nr == 1 and R > slab:
        # Guarantee >= 2 row blocks on the "parallel" axis (v7x megacore).
        tr = min(tr, _round_up(pl.cdiv(R, 2), slab))
        nr = pl.cdiv(R, tr)
    need_row_mask = (R % tr) != 0      # last block partial -> mask garbage rows

    chunk = _CHUNK_CAP
    while tc % chunk != 0:
        chunk //= 2
    n_chunks = tc // chunk
    n_slabs = tr // slab

    kernel = _make_kernel(slab=slab, n_slabs=n_slabs, chunk=chunk, n_chunks=n_chunks,
                          rows_total=R, row_tile=tr, need_row_mask=need_row_mask,
                          weighted=use_target_weight)

    pred_spec = pl.BlockSpec((tr, tc), lambda i, j: (i, j))
    gt_spec = pl.BlockSpec((tr, tc), lambda i, j: (i, j))
    out_spec = pl.BlockSpec((None, _SUBLANE, _LANE), lambda i, j: (i, 0, 0))
    out_shape = jax.ShapeDtypeStruct((nr, _SUBLANE, _LANE), jnp.float32)
    cparams = pltpu.CompilerParams(
        dimension_semantics=("parallel", "arbitrary"),
        vmem_limit_bytes=_VMEM_LIMIT_BYTES,
    )

    if use_target_weight:
        tw = target_weight.astype(jnp.float32).reshape(B, J_real)   # tiny
        if J != J_real:                                             # J == 2 * J_real
            tw = jnp.concatenate([tw, tw], axis=1)                  # j -> j % J_real
        w_rows = tw.reshape(R, 1)
        w_spec = pl.BlockSpec((tr, 1), lambda i, j: (i, 0))
        partials = pl.pallas_call(
            kernel,
            out_shape=out_shape,
            grid=(nr, nc),
            in_specs=[pred_spec, gt_spec, w_spec],
            out_specs=out_spec,
            compiler_params=cparams,
        )(pred, gt, w_rows)
    else:
        partials = pl.pallas_call(
            kernel,
            out_shape=out_shape,
            grid=(nr, nc),
            in_specs=[pred_spec, gt_spec],
            out_specs=out_spec,
            compiler_params=cparams,
        )(pred, gt)

    # Single scale at the end: 0.5 * per-joint mean over (B, HW) * (1/J).
    scale = 0.5 / (J * B * HW)
    return jnp.sum(partials) * scale


def _reference(output, target, target_weight, use_target_weight=True):
    """Pure-JAX reference mirroring the PyTorch loop (compute in f32)."""
    B, J, H, W = output.shape
    J_real = target_weight.shape[1]
    pred = output.astype(jnp.float32).reshape(B, J, -1)
    gt = target.astype(jnp.float32).reshape(B, J, -1)
    loss = 0.0
    for idx in range(J):
        hp = pred[:, idx, :]
        hg = gt[:, idx, :]
        if use_target_weight:
            w = target_weight[:, idx % J_real].astype(jnp.float32)   # (B, 1)
            hp = hp * w
            hg = hg * w
        loss += 0.5 * jnp.mean((hp - hg) ** 2)
    return loss / J


if __name__ == "__main__":
    key = jax.random.PRNGKey(0)
    k1, k2, k3, k4, k5 = jax.random.split(key, 5)

    B, J, H, W = 2, 4, 16, 16

    output = jax.random.normal(k1, (B, J, H, W), dtype=jnp.float32)
    target = jax.random.normal(k2, (B, J, H, W), dtype=jnp.float32)
    target_weight = jax.random.uniform(k3, (B, J, 1), dtype=jnp.float32)

    # Weighted path (J == J_real).
    loss = joints_mse_loss(output, target, target_weight, use_target_weight=True)
    jax.block_until_ready(loss)
    ref = _reference(output, target, target_weight, True)
    assert jnp.allclose(loss, ref, rtol=1e-5, atol=1e-6), (loss, ref)

    # No-weight specialization.
    loss_nw = joints_mse_loss(output, target, target_weight, use_target_weight=False)
    jax.block_until_ready(loss_nw)
    ref_nw = _reference(output, target, target_weight, False)
    assert jnp.allclose(loss_nw, ref_nw, rtol=1e-5, atol=1e-6), (loss_nw, ref_nw)

    # J == 2 * J_real path (weights repeat with j % J_real).
    tw_half = jax.random.uniform(k4, (B, J // 2, 1), dtype=jnp.float32)
    loss_half = joints_mse_loss(output, target, tw_half, use_target_weight=True)
    jax.block_until_ready(loss_half)
    ref_half = _reference(output, target, tw_half, True)
    assert jnp.allclose(loss_half, ref_half, rtol=1e-5, atol=1e-6), (loss_half, ref_half)

    # Native bf16 streaming path (upcast happens inside the kernel, slab = 16 rows).
    Jb = 8
    out_bf = jax.random.normal(k5, (B, Jb, H, W), dtype=jnp.bfloat16)
    tgt_bf = jax.random.normal(k1, (B, Jb, H, W), dtype=jnp.bfloat16)
    tw_bf = jax.random.uniform(k2, (B, Jb, 1), dtype=jnp.float32)
    loss_bf = joints_mse_loss(out_bf, tgt_bf, tw_bf, use_target_weight=True)
    jax.block_until_ready(loss_bf)
    ref_bf = _reference(out_bf, tgt_bf, tw_bf, True)
    assert jnp.allclose(loss_bf, ref_bf, rtol=1e-4, atol=1e-6), (loss_bf, ref_bf)

    print("KERNEL_OK")
</pallas_src>

<mosaic_0001>
module attributes {stable_mosaic.version = 11 : i64} {
  func.func @kernel(%arg0: i32, %arg1: i32, %arg2: memref<8x256xf32, #tpu.memory_space<vmem>>, %arg3: memref<8x256xf32, #tpu.memory_space<vmem>>, %arg4: memref<8x1xf32, #tpu.memory_space<vmem>>, %arg5: memref<1x8x128xf32, #tpu.memory_space<vmem>>) attributes {dimension_semantics = [#tpu.dimension_semantics<parallel>, #tpu.dimension_semantics<arbitrary>], iteration_bounds = array<i64: 1, 1>, scalar_prefetch = 0 : i64, scratch_operands = 0 : i64, tpu.core_type = #tpu.core_type<tc>, window_params = [{transform_indices = @transform_0, window_bounds = array<i64: 8, 256>}, {transform_indices = @transform_1, window_bounds = array<i64: 8, 256>}, {transform_indices = @transform_2, window_bounds = array<i64: 8, 1>}, {transform_indices = @transform_3, window_bounds = array<i64: 1, 8, 128>}]} {
    %cst = arith.constant 0.000000e+00 : f32
    %0 = vector.broadcast %cst : f32 to vector<8x256xf32>
    %c0_i32 = arith.constant 0 : i32
    %c8_i32 = arith.constant 8 : i32
    %1 = arith.muli %c0_i32, %c8_i32 : i32
    %2 = tpu.assume_multiple %1, 8 : i32
    %3 = arith.index_cast %2 : i32 to index
    %c0 = arith.constant 0 : index
    %4 = vector.load %arg4[%3, %c0] : memref<8x1xf32, #tpu.memory_space<vmem>>, vector<8x1xf32>
    %5 = vector.shape_cast %4 : vector<8x1xf32> to vector<8x1xf32>
    %6 = vector.broadcast %5 : vector<8x1xf32> to vector<8x256xf32>
    %7 = arith.index_cast %2 : i32 to index
    %c0_0 = arith.constant 0 : index
    %8 = vector.load %arg2[%7, %c0_0] : memref<8x256xf32, #tpu.memory_space<vmem>>, vector<8x256xf32>
    %9 = arith.index_cast %2 : i32 to index
    %c0_1 = arith.constant 0 : index
    %10 = vector.load %arg3[%9, %c0_1] : memref<8x256xf32, #tpu.memory_space<vmem>>, vector<8x256xf32>
    %11 = arith.subf %8, %10 : vector<8x256xf32>
    %12 = arith.mulf %11, %6 : vector<8x256xf32>
    %13 = arith.mulf %12, %12 : vector<8x256xf32>
    %14 = arith.addf %0, %13 : vector<8x256xf32>
    %c1_i32 = arith.constant 1 : i32
    %15 = vector.extract_strided_slice %14 {offsets = [0, 0], sizes = [8, 128], strides = [1, 1]} : vector<8x256xf32> to vector<8x128xf32>
    %16 = vector.extract_strided_slice %14 {offsets = [0, 128], sizes = [8, 128], strides = [1, 1]} : vector<8x256xf32> to vector<8x128xf32>
    %17 = arith.addf %15, %16 : vector<8x128xf32>
    %c0_i32_2 = arith.constant 0 : i32
    %18 = arith.cmpi eq, %arg1, %c0_i32_2 : i32
    %19 = arith.extui %18 : i1 to i32
    %c0_i32_3 = arith.constant 0 : i32
    %20 = arith.cmpi ne, %19, %c0_i32_3 : i32
    scf.if %20 {
      %cst_10 = arith.constant 0.000000e+00 : f32
      %27 = vector.broadcast %cst_10 : f32 to vector<8x128xf32>
      %c0_11 = arith.constant 0 : index
      %c0_12 = arith.constant 0 : index
      %c0_13 = arith.constant 0 : index
      %28 = vector.load %arg5[%c0_11, %c0_12, %c0_13] : memref<1x8x128xf32, #tpu.memory_space<vmem>>, vector<1x8x128xf32>
      %29 = vector.shape_cast %28 : vector<1x8x128xf32> to vector<8x128xf32>
      %30 = vector.shape_cast %27 : vector<8x128xf32> to vector<1x8x128xf32>
      tpu.vector_store %arg5[%c0_11, %c0_12, %c0_13], %30 {strides = array<i32>} : memref<1x8x128xf32, #tpu.memory_space<vmem>>, vector<1x8x128xf32>,
    } else {
    }
    %c0_4 = arith.constant 0 : index
    %c0_5 = arith.constant 0 : index
    %c0_6 = arith.constant 0 : index
    %21 = vector.load %arg5[%c0_4, %c0_5, %c0_6] : memref<1x8x128xf32, #tpu.memory_space<vmem>>, vector<1x8x128xf32>
    %22 = vector.shape_cast %21 : vector<1x8x128xf32> to vector<8x128xf32>
    %23 = arith.addf %22, %17 : vector<8x128xf32>
    %c0_7 = arith.constant 0 : index
    %c0_8 = arith.constant 0 : index
    %c0_9 = arith.constant 0 : index
    %24 = vector.load %arg5[%c0_7, %c0_8, %c0_9] : memref<1x8x128xf32, #tpu.memory_space<vmem>>, vector<1x8x128xf32>
    %25 = vector.shape_cast %24 : vector<1x8x128xf32> to vector<8x128xf32>
    %26 = vector.shape_cast %23 : vector<8x128xf32> to vector<1x8x128xf32>
    tpu.vector_store %arg5[%c0_7, %c0_8, %c0_9], %26 {strides = array<i32>} : memref<1x8x128xf32, #tpu.memory_space<vmem>>, vector<1x8x128xf32>,
    return
  }
  func.func @transform_0(%arg0: i32, %arg1: i32) -> (i32, i32) {
    %c0_i32 = arith.constant 0 : i32
    return %arg0, %arg1 : i32, i32
  }
  func.func @transform_1(%arg0: i32, %arg1: i32) -> (i32, i32) {
    %c0_i32 = arith.constant 0 : i32
    return %arg0, %arg1 : i32, i32
  }
  func.func @transform_2(%arg0: i32, %arg1: i32) -> (i32, i32) {
    %c0_i32 = arith.constant 0 : i32
    %c0_i32_0 = arith.constant 0 : i32
    return %arg0, %c0_i32 : i32, i32
  }
  func.func @transform_3(%arg0: i32, %arg1: i32) -> (i32, i32, i32) {
    %c0_i32 = arith.constant 0 : i32
    %c0_i32_0 = arith.constant 0 : i32
    %c0_i32_1 = arith.constant 0 : i32
    return %arg0, %c0_i32, %c0_i32_0 : i32, i32, i32
  }
}

</mosaic_0001>

<llo_original>
// kernel: joints_mse_loss.1
$region0: #{joints_mse_loss.1}
  #allocation0 [shape = 'u32[]', space=smem, size = 0x4, offset = 0x4, fixed_abs, tag = 'smem constant byte address 0x4 - core index']
  #allocation1 [shape = 'u32[144,128]{1,0:T(1,128)}', space=vmem, size = 0x12000, scoped, tag = 'internal scratch']
  %s0 = inlined_call_operand.vmem [shape: f32[8,256], index: 0, kind: input, shape index: {}]
  %s1 = inlined_call_operand.vmem [shape: f32[8,256], index: 1, kind: input, shape index: {}]
  %s2 = inlined_call_operand.vmem [shape: f32[8,1], index: 2, kind: input, shape index: {}]
  %s3 = inlined_call_operand.vmem [shape: f32[1,8,128], index: 3, kind: output, shape index: {}]
  %s4 = sld [smem:[#allocation0]]
  $region26: #{joints_mse_loss.1} parent=0
    _
  %s6 = ssub.s32 1, %s4
  %s7 = scalar_select 0, %s6, %s4
  // Predicated region
  $region2: #{joints_mse_loss.1} parent=0 // pred_check
    _
  $region3: #{joints_mse_loss.1} parent=0 // pred_check_branch
    %9 = sbr.rel (0) target = $region5
  $region4: #{joints_mse_loss.1} parent=0 // pred_region
    _
  $region5: #{joints_mse_loss.1} parent=0 // pred_fallthru
    _
  // Predicated region
  $region6: #{joints_mse_loss.1} parent=0 // pred_check
    _
  $region7: #{joints_mse_loss.1} parent=0 // pred_check_branch
    %11 = sbr.rel (0) target = $region9
  $region8: #{joints_mse_loss.1} parent=0 // pred_region
    _
  $region9: #{joints_mse_loss.1} parent=0 // pred_fallthru
    _
  // Predicated region
  $region10: #{joints_mse_loss.1} parent=0 // pred_check
    _
  $region11: #{joints_mse_loss.1} parent=0 // pred_check_branch
    %13 = sbr.rel (0) target = $region13
  $region12: #{joints_mse_loss.1} parent=0 // pred_region
    _
  $region13: #{joints_mse_loss.1} parent=0 // pred_fallthru
    _
  %v14 = vld [vmem:[%s2] sm:$0xff]
  %16 = vset.pattern.permute.xlu0 0
  %17 = vperm.xlu0 %16, %v14
  %v18 = vpop.permute.xlu0 %17
  %s20 = smul.u32 0, 2
  %s21 = smul.addr %s20, 8
  %s22 = scalar_lea.vmem %s0, %s21
  %v23 = vld [vmem:[%s22] sm:$0xff]
  %v24 = vld [vmem:[%s22 + $0x8] sm:$0xff]
  %s25 = smul.addr %s20, 8
  %s26 = scalar_lea.vmem %s1, %s25
  %v27 = vld [vmem:[%s26] sm:$0xff]
  %v28 = vld [vmem:[%s26 + $0x8] sm:$0xff]
  %v29 = vsub.f32 %v23, %v27
  %v30 = vsub.f32 %v24, %v28
  %v31 = vmul.f32 %v29, %v18
  %v32 = vmul.f32 %v30, %v18
  %v33 = vmul.f32 %v31, %v31
  %v34 = vmul.f32 %v32, %v32
  %v35 = vadd.f32 %v33, 0.0
  %v36 = vadd.f32 %v34, 0.0
  %v37 = vadd.f32 %v35, %v36
  %p38 = scmp.eq.s32.totalorder 0, 0
  // Predicated region
  $region14: #{joints_mse_loss.1} parent=0 // pred_check
    %p39 = pneg %p38
  $region15: #{joints_mse_loss.1} parent=0 // pred_check_branch
    %41 = sbr.rel (%p39) target = $region17
  $region16: #{joints_mse_loss.1} parent=0 // pred_region
    %42 = vst [vmem:[%s3] sm:$0xff] 0.0
  $region17: #{joints_mse_loss.1} parent=0 // pred_fallthru
    _
  %v43 = vld [vmem:[%s3] sm:$0xff]
  %v44 = vadd.f32 %v43, %v37
  %45 = vst [vmem:[%s3] sm:$0xff] %v44
  // Predicated region
  $region18: #{joints_mse_loss.1} parent=0 // pred_check
    _
  $region19: #{joints_mse_loss.1} parent=0 // pred_check_branch
    %47 = sbr.rel (0) target = $region21
  $region20: #{joints_mse_loss.1} parent=0 // pred_region
    _
  $region21: #{joints_mse_loss.1} parent=0 // pred_fallthru
    _
  // Predicated region
  $region22: #{joints_mse_loss.1} parent=0 // pred_check
    _
  $region23: #{joints_mse_loss.1} parent=0 // pred_check_branch
    %49 = sbr.rel (0) target = $region25
  $region24: #{joints_mse_loss.1} parent=0 // pred_region
    _
  $region25: #{joints_mse_loss.1} parent=0 // pred_fallthru
    _

</llo_original>
